<compile_context>
chip_gen: v5e
topology: v5e:2x2
jax: 0.10.0
libtpu: 0.0.40
codegen_flags: <defaults>
</compile_context>

<pallas_src>
import functools

import jax
import jax.numpy as jnp
from jax.experimental import pallas as pl
from jax.experimental.pallas import tpu as pltpu


def _mlp_kernel(x_ref, w1_ref, b1_ref, w2_ref, b2_ref, w3_ref, b3_ref, o_ref):
    # Feature-major: activations are (features, batch_tile); batch is on the lane axis.
    x = x_ref[...]                                              # (D, T)
    # layer 1: (H, D) @ (D, T) -> (H, T), f32 accumulation on the MXU
    h1 = jnp.dot(w1_ref[...], x, preferred_element_type=jnp.float32)
    h1 = jnp.maximum(h1 + b1_ref[...], 0.0)                     # bias + ReLU in f32 (VPU)
    # layer 2: (H, H) @ (H, T) -> (H, T)
    h2 = jnp.dot(w2_ref[...], h1.astype(w2_ref.dtype),
                 preferred_element_type=jnp.float32)
    h2 = jnp.maximum(h2 + b2_ref[...], 0.0)
    # layer 3 (64 -> 1): VPU multiply + sublane reduce instead of a 1-wide MXU matmul
    out = jnp.sum(h2 * w3_ref[...], axis=0, keepdims=True) + b3_ref[...]   # (1, T)
    o_ref[...] = out.astype(o_ref.dtype)


def _round_up(n, m):
    return ((n + m - 1) // m) * m


@functools.partial(jax.jit, static_argnames=("batch_tile", "use_bf16"))
def action_scoring_forward(x, params, *, batch_tile=512, use_bf16=False):
    """x: (B, input_dim) float32. Returns (B,) float32 = squeeze(-1) of the (B,1) net output."""
    w1, b1, w2, b2, w3, b3 = params
    B, D = x.shape
    H = w1.shape[1]  # 64

    assert batch_tile % 128 == 0, "batch_tile must be a multiple of 128 (lane width)"
    # Effective tile: never larger than the (lane-aligned) batch; pad batch to a tile multiple.
    bt = min(batch_tile, _round_up(B, 128))
    B_pad = _round_up(B, bt)
    grid = (B_pad // bt,)

    # Feature-major layout: batch on the last (lane) axis everywhere.
    x_t = jnp.pad(x.T, ((0, 0), (0, B_pad - B)))   # (D, B_pad)
    w1_t = w1.T                                    # (H, D)
    w2_t = w2.T                                    # (H, H)
    b1_c = b1.reshape(H, 1)
    b2_c = b2.reshape(H, 1)
    w3_c = w3.reshape(H, 1)
    b3_c = b3.reshape(1, 1)

    if use_bf16:
        # bf16 MXU inputs (v6e/v7x native path; valid on v5e too); accumulation stays f32.
        x_t = x_t.astype(jnp.bfloat16)
        w1_t = w1_t.astype(jnp.bfloat16)
        w2_t = w2_t.astype(jnp.bfloat16)

    flops = 2 * B_pad * (D * H + H * H + H)
    bytes_accessed = (
        x_t.size * x_t.dtype.itemsize          # x (dominant traffic)
        + B_pad * 4                            # output
        + w1_t.size * w1_t.dtype.itemsize
        + w2_t.size * w2_t.dtype.itemsize
        + (H + H + H + 1) * 4                  # b1, b2, w3, b3
    )

    out = pl.pallas_call(
        _mlp_kernel,
        out_shape=jax.ShapeDtypeStruct((1, B_pad), jnp.float32),
        grid_spec=pltpu.PrefetchScalarGridSpec(
            num_scalar_prefetch=0,
            grid=grid,
            in_specs=[
                pl.BlockSpec((D, bt), lambda i: (0, i)),   # x.T tile (lane-dense batch)
                pl.BlockSpec((H, D), lambda i: (0, 0)),    # W1.T (full, constant across grid)
                pl.BlockSpec((H, 1), lambda i: (0, 0)),    # b1 column
                pl.BlockSpec((H, H), lambda i: (0, 0)),    # W2.T
                pl.BlockSpec((H, 1), lambda i: (0, 0)),    # b2 column
                pl.BlockSpec((H, 1), lambda i: (0, 0)),    # w3 column
                pl.BlockSpec((1, 1), lambda i: (0, 0)),    # b3
            ],
            out_specs=pl.BlockSpec((1, bt), lambda i: (0, i)),   # lane-dense output block
        ),
        compiler_params=pltpu.CompilerParams(
            dimension_semantics=("parallel",),   # >=2 grid steps -> shards across v7x's 2 TCs
        ),
        cost_estimate=pl.CostEstimate(
            flops=flops, transcendentals=0, bytes_accessed=bytes_accessed
        ),
    )(x_t, w1_t, b1_c, w2_t, b2_c, w3_c, b3_c)

    return out[0, :B]  # drop padding + squeeze(-1)


def init_params(input_dim, key):
    """Deterministic synthetic init matching the nn.Linear shapes of the PyTorch module.
    Weights stored as (in, out); the wrapper transposes for the feature-major kernel."""
    k1, k2, k3, k4, k5, k6 = jax.random.split(key, 6)
    s1 = 1.0 / jnp.sqrt(input_dim)
    s2 = 1.0 / jnp.sqrt(64.0)
    w1 = jax.random.uniform(k1, (input_dim, 64), jnp.float32, -s1, s1)
    b1 = jax.random.uniform(k2, (64,), jnp.float32, -s1, s1)
    w2 = jax.random.uniform(k3, (64, 64), jnp.float32, -s2, s2)
    b2 = jax.random.uniform(k4, (64,), jnp.float32, -s2, s2)
    w3 = jax.random.uniform(k5, (64, 1), jnp.float32, -s2, s2)
    b3 = jax.random.uniform(k6, (1,), jnp.float32, -s2, s2)
    return (w1, b1, w2, b2, w3, b3)


def reference_forward(x, params, *, use_bf16=False):
    w1, b1, w2, b2, w3, b3 = params
    if use_bf16:
        x = x.astype(jnp.bfloat16)
        w1 = w1.astype(jnp.bfloat16)
        w2 = w2.astype(jnp.bfloat16)
    h1 = jnp.maximum(jnp.dot(x, w1, preferred_element_type=jnp.float32) + b1, 0.0)
    h2 = jnp.maximum(jnp.dot(h1.astype(w2.dtype), w2,
                             preferred_element_type=jnp.float32) + b2, 0.0)
    return jnp.dot(h2, w3, preferred_element_type=jnp.float32)[:, 0] + b3[0]


if __name__ == "__main__":
    key = jax.random.PRNGKey(0)
    k_x, k_p, k_x2 = jax.random.split(key, 3)

    input_dim = 32
    params = init_params(input_dim, k_p)

    # 1) Main case: enough rows for 4 grid steps at tile=512 (keeps v7x's 2 TCs busy).
    B = 2048
    x = jax.random.normal(k_x, (B, input_dim), jnp.float32)
    out = jax.block_until_ready(action_scoring_forward(x, params, batch_tile=512))
    ref = reference_forward(x, params)
    assert out.shape == (B,)
    assert jnp.allclose(out, ref, atol=1e-4, rtol=1e-4), "f32 mismatch vs reference"

    # 2) Small / ragged batch exercises the pad-and-slice path.
    B2 = 5
    x2 = jax.random.normal(k_x2, (B2, input_dim), jnp.float32)
    out2 = jax.block_until_ready(action_scoring_forward(x2, params, batch_tile=512))
    ref2 = reference_forward(x2, params)
    assert out2.shape == (B2,)
    assert jnp.allclose(out2, ref2, atol=1e-4, rtol=1e-4), "small-batch mismatch vs reference"

    # 3) bf16 matmul-input fast path (v6e/v7x), f32 accumulation.
    out_bf = jax.block_until_ready(
        action_scoring_forward(x, params, batch_tile=512, use_bf16=True))
    ref_bf = reference_forward(x, params, use_bf16=True)
    assert jnp.allclose(out_bf, ref_bf, atol=2e-2, rtol=2e-2), "bf16 mismatch vs bf16 reference"

    print("KERNEL_OK")
</pallas_src>

<mosaic_0001>
module attributes {stable_mosaic.version = 11 : i64} {
  func.func @_mlp_kernel(%arg0: i32, %arg1: memref<32x512xf32, #tpu.memory_space<vmem>>, %arg2: memref<64x32xf32, #tpu.memory_space<vmem>>, %arg3: memref<64x1xf32, #tpu.memory_space<vmem>>, %arg4: memref<64x64xf32, #tpu.memory_space<vmem>>, %arg5: memref<64x1xf32, #tpu.memory_space<vmem>>, %arg6: memref<64x1xf32, #tpu.memory_space<vmem>>, %arg7: memref<1x1xf32, #tpu.memory_space<vmem>>, %arg8: memref<1x512xf32, #tpu.memory_space<vmem>>) attributes {dimension_semantics = [#tpu.dimension_semantics<parallel>], iteration_bounds = array<i64: 4>, scalar_prefetch = 0 : i64, scratch_operands = 0 : i64, tpu.core_type = #tpu.core_type<tc>, window_params = [{transform_indices = @transform_0, window_bounds = array<i64: 32, 512>}, {pipeline_mode = #tpu.pipeline_mode<synchronous>, transform_indices = @transform_1, window_bounds = array<i64: 64, 32>}, {pipeline_mode = #tpu.pipeline_mode<synchronous>, transform_indices = @transform_2, window_bounds = array<i64: 64, 1>}, {pipeline_mode = #tpu.pipeline_mode<synchronous>, transform_indices = @transform_3, window_bounds = array<i64: 64, 64>}, {pipeline_mode = #tpu.pipeline_mode<synchronous>, transform_indices = @transform_4, window_bounds = array<i64: 64, 1>}, {pipeline_mode = #tpu.pipeline_mode<synchronous>, transform_indices = @transform_5, window_bounds = array<i64: 64, 1>}, {pipeline_mode = #tpu.pipeline_mode<synchronous>, transform_indices = @transform_6, window_bounds = array<i64: 1, 1>}, {transform_indices = @transform_7, window_bounds = array<i64: 1, 512>}]} {
    %c0 = arith.constant 0 : index
    %c0_0 = arith.constant 0 : index
    %0 = vector.load %arg1[%c0, %c0_0] : memref<32x512xf32, #tpu.memory_space<vmem>>, vector<32x512xf32>
    %c0_1 = arith.constant 0 : index
    %c0_2 = arith.constant 0 : index
    %1 = vector.load %arg2[%c0_1, %c0_2] : memref<64x32xf32, #tpu.memory_space<vmem>>, vector<64x32xf32>
    %cst = arith.constant dense<0.000000e+00> : vector<64x512xf32>
    %2 = tpu.matmul %1, %0, %cst {dimension_numbers = #tpu.dot_dimension_numbers<[1], [0], [0], [1], [0, 0, 1, 1], [], []>} : vector<64x32xf32>, vector<32x512xf32>, vector<64x512xf32> -> vector<64x512xf32>
    %c0_3 = arith.constant 0 : index
    %c0_4 = arith.constant 0 : index
    %3 = vector.load %arg3[%c0_3, %c0_4] : memref<64x1xf32, #tpu.memory_space<vmem>>, vector<64x1xf32>
    %4 = vector.broadcast %3 : vector<64x1xf32> to vector<64x512xf32>
    %5 = arith.addf %2, %4 : vector<64x512xf32>
    %cst_5 = arith.constant 0.000000e+00 : f32
    %6 = vector.broadcast %cst_5 : f32 to vector<64x512xf32>
    %7 = arith.maximumf %5, %6 : vector<64x512xf32>
    %c0_6 = arith.constant 0 : index
    %c0_7 = arith.constant 0 : index
    %8 = vector.load %arg4[%c0_6, %c0_7] : memref<64x64xf32, #tpu.memory_space<vmem>>, vector<64x64xf32>
    %cst_8 = arith.constant dense<0.000000e+00> : vector<64x512xf32>
    %9 = tpu.matmul %8, %7, %cst_8 {dimension_numbers = #tpu.dot_dimension_numbers<[1], [0], [0], [1], [0, 0, 1, 1], [], []>} : vector<64x64xf32>, vector<64x512xf32>, vector<64x512xf32> -> vector<64x512xf32>
    %c0_9 = arith.constant 0 : index
    %c0_10 = arith.constant 0 : index
    %10 = vector.load %arg5[%c0_9, %c0_10] : memref<64x1xf32, #tpu.memory_space<vmem>>, vector<64x1xf32>
    %11 = vector.broadcast %10 : vector<64x1xf32> to vector<64x512xf32>
    %12 = arith.addf %9, %11 : vector<64x512xf32>
    %cst_11 = arith.constant 0.000000e+00 : f32
    %13 = vector.broadcast %cst_11 : f32 to vector<64x512xf32>
    %14 = arith.maximumf %12, %13 : vector<64x512xf32>
    %c0_12 = arith.constant 0 : index
    %c0_13 = arith.constant 0 : index
    %15 = vector.load %arg6[%c0_12, %c0_13] : memref<64x1xf32, #tpu.memory_space<vmem>>, vector<64x1xf32>
    %16 = vector.broadcast %15 : vector<64x1xf32> to vector<64x512xf32>
    %17 = arith.mulf %14, %16 : vector<64x512xf32>
    %cst_14 = arith.constant dense<0.000000e+00> : vector<512xf32>
    %18 = vector.multi_reduction <add>, %17, %cst_14 [0] : vector<64x512xf32> to vector<512xf32>
    %19 = vector.shape_cast %18 : vector<512xf32> to vector<1x512xf32>
    %c0_15 = arith.constant 0 : index
    %c0_16 = arith.constant 0 : index
    %20 = vector.load %arg7[%c0_15, %c0_16] : memref<1x1xf32, #tpu.memory_space<vmem>>, vector<1x1xf32>
    %21 = vector.broadcast %20 : vector<1x1xf32> to vector<1x512xf32>
    %22 = arith.addf %19, %21 : vector<1x512xf32>
    %c0_17 = arith.constant 0 : index
    %c0_18 = arith.constant 0 : index
    %23 = vector.load %arg8[%c0_17, %c0_18] : memref<1x512xf32, #tpu.memory_space<vmem>>, vector<1x512xf32>
    tpu.vector_store %arg8[%c0_17, %c0_18], %22 {strides = array<i32>} : memref<1x512xf32, #tpu.memory_space<vmem>>, vector<1x512xf32>,
    return
  }
  func.func @transform_0(%arg0: i32) -> (i32, i32) {
    %c0_i32 = arith.constant 0 : i32
    %c0_i32_0 = arith.constant 0 : i32
    return %c0_i32, %arg0 : i32, i32
  }
  func.func @transform_1(%arg0: i32) -> (i32, i32) {
    %c0_i32 = arith.constant 0 : i32
    %c0_i32_0 = arith.constant 0 : i32
    %c0_i32_1 = arith.constant 0 : i32
    return %c0_i32, %c0_i32_0 : i32, i32
  }
  func.func @transform_2(%arg0: i32) -> (i32, i32) {
    %c0_i32 = arith.constant 0 : i32
    %c0_i32_0 = arith.constant 0 : i32
    %c0_i32_1 = arith.constant 0 : i32
    return %c0_i32, %c0_i32_0 : i32, i32
  }
  func.func @transform_3(%arg0: i32) -> (i32, i32) {
    %c0_i32 = arith.constant 0 : i32
    %c0_i32_0 = arith.constant 0 : i32
    %c0_i32_1 = arith.constant 0 : i32
    return %c0_i32, %c0_i32_0 : i32, i32
  }
  func.func @transform_4(%arg0: i32) -> (i32, i32) {
    %c0_i32 = arith.constant 0 : i32
    %c0_i32_0 = arith.constant 0 : i32
    %c0_i32_1 = arith.constant 0 : i32
    return %c0_i32, %c0_i32_0 : i32, i32
  }
  func.func @transform_5(%arg0: i32) -> (i32, i32) {
    %c0_i32 = arith.constant 0 : i32
    %c0_i32_0 = arith.constant 0 : i32
    %c0_i32_1 = arith.constant 0 : i32
    return %c0_i32, %c0_i32_0 : i32, i32
  }
  func.func @transform_6(%arg0: i32) -> (i32, i32) {
    %c0_i32 = arith.constant 0 : i32
    %c0_i32_0 = arith.constant 0 : i32
    %c0_i32_1 = arith.constant 0 : i32
    return %c0_i32, %c0_i32_0 : i32, i32
  }
  func.func @transform_7(%arg0: i32) -> (i32, i32) {
    %c0_i32 = arith.constant 0 : i32
    %c0_i32_0 = arith.constant 0 : i32
    return %c0_i32, %arg0 : i32, i32
  }
}

</mosaic_0001>

<llo_original>
// kernel: action_scoring_forward.1
$region0: #{action_scoring_forward.1}
  #allocation0 [shape = 'u32[]', space=smem, size = 0x4, offset = 0x4, fixed_abs, tag = 'smem constant byte address 0x4 - core index']
  #allocation1 [shape = 'u32[72,128]{1,0:T(1,128)}', space=vmem, size = 0x9000, scoped, tag = 'internal scratch']
  #allocation2 [shape = 'f32[1,1]{1,0:T(1,128)S(1)}', space=vmem, size = 0x200, scoped, tag = 'scoped memory for action_scoring_forward.1']
  %s0 = inlined_call_operand.hbm [shape: f32[32,2048], index: 0, kind: input, shape index: {}]
  %s1 = inlined_call_operand.vmem [shape: f32[64,32], index: 1, kind: input, shape index: {}]
  %s2 = inlined_call_operand.vmem [shape: f32[64,1], index: 2, kind: input, shape index: {}]
  %s3 = inlined_call_operand.vmem [shape: f32[64,64], index: 3, kind: input, shape index: {}]
  %s4 = inlined_call_operand.vmem [shape: f32[64,1], index: 4, kind: input, shape index: {}]
  %s5 = inlined_call_operand.vmem [shape: f32[64,1], index: 5, kind: input, shape index: {}]
  %s6 = inlined_call_operand.<no memory space> [shape: f32[1,1], index: 6, kind: input, shape index: {}]
  %s7 = inlined_call_operand.hbm [shape: f32[1,2048], index: 7, kind: output, shape index: {}]
  %s8 = sld [smem:[#allocation0]]
  $region65: #{action_scoring_forward.1} parent=0
    _
  %s10 = ssub.s32 1, %s8
  %s11 = scalar_select 0, %s10, %s8
  %v12 = vstv %s6
  %13 = vst [vmem:[#allocation2] sm:$0x1] %v12
  $region1: #{action_scoring_forward.1} parent=0
    #allocation3 [shape = 'u8[131072]{0}', space=vmem, size = 0x20000, scoped, tag = 'input window, operand 0']
    #allocation4 [shape = 's32[2]{0}', space=sflag, size = 0x8, scoped, tag = 'scoped memory for action_scoring_forward.1']
    #allocation5 [shape = 's32[2]{0}', space=sflag, size = 0x8, scoped, tag = 'scoped memory for action_scoring_forward.1']
    #allocation6 [shape = 'u8[4096]{0}', space=vmem, size = 0x1000, scoped, tag = 'output window, operand 0']
    %14 = vsyncpa [#allocation4], 0
    %s15 = scalar_lea.sflag [#allocation4], 1
    %16 = vsyncpa %s15, 0
    %17 = vsyncpa [#allocation5], 0
    %s18 = scalar_lea.sflag [#allocation5], 1
    %19 = vsyncpa %s18, 0
    loop: start=0, step=1, limit=6
    $region2: #{action_scoring_forward.1} parent=1 // loop_pre_header
      _
    $region3: #{action_scoring_forward.1} parent=1 // loop_header
      %s21 = sphi 0, %s25
      %p22 = scmp.ge.s32.totalorder %s21, 6
      %s31 = sphi 0, %s33
      %s34 = sphi 0, %s31
      %s35 = sphi 0, %s34
      %s51 = sphi 0, %s35
      %s55 = sphi 0, %s55
      %s57 = sphi 0, %s55
      %s58 = sphi 0, %s57
      %s72 = sphi 0, %s58
      %s76 = sphi 0, %s76
      %s78 = sphi 0, %s76
      %s79 = sphi 0, %s78
      %s93 = sphi 0, %s79
      %s97 = sphi 0, %s97
      %s99 = sphi 0, %s97
      %s100 = sphi 0, %s99
      %s114 = sphi 0, %s100
      %s118 = sphi 0, %s118
      %s120 = sphi 0, %s118
      %s121 = sphi 0, %s120
      %s135 = sphi 0, %s121
      %s139 = sphi 0, %s139
      %s141 = sphi 0, %s139
      %s142 = sphi 0, %s141
      %s156 = sphi 0, %s142
      %s160 = sphi 0, %s160
      %s162 = sphi 0, %s160
      %s163 = sphi 0, %s162
      %s177 = sphi 0, %s163
      %s183 = sphi 0, %s185
      %s186 = sphi 0, %s183
      %s187 = sphi 0, %s186
      %s203 = sphi 0, %s187
    $region4: #{action_scoring_forward.1} parent=1 // loop_header_branch
      %24 = sbr.rel (%p22) target = $region8
    $region5: #{action_scoring_forward.1} parent=1 // loop_body
      %s26 = ssub.s32 %s21, 1
      %s27 = ssub.s32 %s21, 2
      %s28 = sadd.s32 %s21, 1
      %s29 = ssub.s32 %s21, %s28
      %p30 = scmp.eq.s32.totalorder %s29, 0
      %s32 = sadd.s32 %s31, 1
      %s33 = scalar_select %p30, %s31, %s32
      %p36 = pneg %p30
      %p37 = scmp.eq.s32.totalorder %s21, 3
      %p38 = por %p36, %p37
      %p39 = scmp.ne.s32.totalorder %s31, %s34
      %p40 = scmp.eq.s32.totalorder %s21, 0
      %p41 = por %p39, %p40
      %p42 = scmp.ne.s32.totalorder %s31, %s34
      %p43 = scmp.eq.s32.totalorder %s26, 3
      %p44 = por %p42, %p43
      %p45 = scmp.ne.s32.totalorder %s34, %s35
      %p46 = scmp.eq.s32.totalorder %s26, 0
      %p47 = por %p45, %p46
      %p48 = scmp.ne.s32.totalorder %s34, %s35
      %p49 = scmp.eq.s32.totalorder %s27, 3
      %p50 = por %p48, %p49
      %p52 = scmp.ne.s32.totalorder %s35, %s51
      %p53 = scmp.eq.s32.totalorder %s27, 0
      %p54 = por %p52, %p53
      %s56 = sadd.s32 %s55, 1
      %p59 = scmp.eq.s32.totalorder %s21, 3
      %p60 = scmp.ne.s32.totalorder %s55, %s57
      %p61 = scmp.eq.s32.totalorder %s21, 0
      %p62 = por %p60, %p61
      %p63 = scmp.ne.s32.totalorder %s55, %s57
      %p64 = scmp.eq.s32.totalorder %s26, 3
      %p65 = por %p63, %p64
      %p66 = scmp.ne.s32.totalorder %s57, %s58
      %p67 = scmp.eq.s32.totalorder %s26, 0
      %p68 = por %p66, %p67
      %p69 = scmp.ne.s32.totalorder %s57, %s58
      %p70 = scmp.eq.s32.totalorder %s27, 3
      %p71 = por %p69, %p70
      %p73 = scmp.ne.s32.totalorder %s58, %s72
      %p74 = scmp.eq.s32.totalorder %s27, 0
      %p75 = por %p73, %p74
      %s77 = sadd.s32 %s76, 1
      %p80 = scmp.eq.s32.totalorder %s21, 3
      %p81 = scmp.ne.s32.totalorder %s76, %s78
      %p82 = scmp.eq.s32.totalorder %s21, 0
      %p83 = por %p81, %p82
      %p84 = scmp.ne.s32.totalorder %s76, %s78
      %p85 = scmp.eq.s32.totalorder %s26, 3
      %p86 = por %p84, %p85
      %p87 = scmp.ne.s32.totalorder %s78, %s79
      %p88 = scmp.eq.s32.totalorder %s26, 0
      %p89 = por %p87, %p88
      %p90 = scmp.ne.s32.totalorder %s78, %s79
      %p91 = scmp.eq.s32.totalorder %s27, 3
      %p92 = por %p90, %p91
      %p94 = scmp.ne.s32.totalorder %s79, %s93
      %p95 = scmp.eq.s32.totalorder %s27, 0
      %p96 = por %p94, %p95
      %s98 = sadd.s32 %s97, 1
      %p101 = scmp.eq.s32.totalorder %s21, 3
      %p102 = scmp.ne.s32.totalorder %s97, %s99
      %p103 = scmp.eq.s32.totalorder %s21, 0
      %p104 = por %p102, %p103
      %p105 = scmp.ne.s32.totalorder %s97, %s99
      %p106 = scmp.eq.s32.totalorder %s26, 3
      %p107 = por %p105, %p106
      %p108 = scmp.ne.s32.totalorder %s99, %s100
      %p109 = scmp.eq.s32.totalorder %s26, 0
      %p110 = por %p108, %p109
      %p111 = scmp.ne.s32.totalorder %s99, %s100
      %p112 = scmp.eq.s32.totalorder %s27, 3
      %p113 = por %p111, %p112
      %p115 = scmp.ne.s32.totalorder %s100, %s114
      %p116 = scmp.eq.s32.totalorder %s27, 0
      %p117 = por %p115, %p116
      %s119 = sadd.s32 %s118, 1
      %p122 = scmp.eq.s32.totalorder %s21, 3
      %p123 = scmp.ne.s32.totalorder %s118, %s120
      %p124 = scmp.eq.s32.totalorder %s21, 0
      %p125 = por %p123, %p124
      %p126 = scmp.ne.s32.totalorder %s118, %s120
      %p127 = scmp.eq.s32.totalorder %s26, 3
      %p128 = por %p126, %p127
      %p129 = scmp.ne.s32.totalorder %s120, %s121
      %p130 = scmp.eq.s32.totalorder %s26, 0
      %p131 = por %p129, %p130
      %p132 = scmp.ne.s32.totalorder %s120, %s121
      %p133 = scmp.eq.s32.totalorder %s27, 3
      %p134 = por %p132, %p133
      %p136 = scmp.ne.s32.totalorder %s121, %s135
      %p137 = scmp.eq.s32.totalorder %s27, 0
      %p138 = por %p136, %p137
      %s140 = sadd.s32 %s139, 1
      %p143 = scmp.eq.s32.totalorder %s21, 3
      %p144 = scmp.ne.s32.totalorder %s139, %s141
      %p145 = scmp.eq.s32.totalorder %s21, 0
      %p146 = por %p144, %p145
      %p147 = scmp.ne.s32.totalorder %s139, %s141
      %p148 = scmp.eq.s32.totalorder %s26, 3
      %p149 = por %p147, %p148
      %p150 = scmp.ne.s32.totalorder %s141, %s142
      %p151 = scmp.eq.s32.totalorder %s26, 0
      %p152 = por %p150, %p151
      %p153 = scmp.ne.s32.totalorder %s141, %s142
      %p154 = scmp.eq.s32.totalorder %s27, 3
      %p155 = por %p153, %p154
      %p157 = scmp.ne.s32.totalorder %s142, %s156
      %p158 = scmp.eq.s32.totalorder %s27, 0
      %p159 = por %p157, %p158
      %s161 = sadd.s32 %s160, 1
      %p164 = scmp.eq.s32.totalorder %s21, 3
      %p165 = scmp.ne.s32.totalorder %s160, %s162
      %p166 = scmp.eq.s32.totalorder %s21, 0
      %p167 = por %p165, %p166
      %p168 = scmp.ne.s32.totalorder %s160, %s162
      %p169 = scmp.eq.s32.totalorder %s26, 3
      %p170 = por %p168, %p169
      %p171 = scmp.ne.s32.totalorder %s162, %s163
      %p172 = scmp.eq.s32.totalorder %s26, 0
      %p173 = por %p171, %p172
      %p174 = scmp.ne.s32.totalorder %s162, %s163
      %p175 = scmp.eq.s32.totalorder %s27, 3
      %p176 = por %p174, %p175
      %p178 = scmp.ne.s32.totalorder %s163, %s177
      %p179 = scmp.eq.s32.totalorder %s27, 0
      %p180 = por %p178, %p179
      %s181 = ssub.s32 %s21, %s28
      %p182 = scmp.eq.s32.totalorder %s181, 0
      %s184 = sadd.s32 %s183, 1
      %s185 = scalar_select %p182, %s183, %s184
      %p188 = pneg %p182
      %p189 = scmp.eq.s32.totalorder %s21, 3
      %p190 = por %p188, %p189
      %p191 = scmp.ne.s32.totalorder %s183, %s186
      %p192 = scmp.eq.s32.totalorder %s21, 0
      %p193 = por %p191, %p192
      %p194 = scmp.ne.s32.totalorder %s183, %s186
      %p195 = scmp.eq.s32.totalorder %s26, 3
      %p196 = por %p194, %p195
      %p197 = scmp.ne.s32.totalorder %s186, %s187
      %p198 = scmp.eq.s32.totalorder %s26, 0
      %p199 = por %p197, %p198
      %p200 = scmp.ne.s32.totalorder %s186, %s187
      %p201 = scmp.eq.s32.totalorder %s27, 3
      %p202 = por %p200, %p201
      %p204 = scmp.ne.s32.totalorder %s187, %s203
      %p205 = scmp.eq.s32.totalorder %s27, 0
      %p206 = por %p204, %p205
      %p207 = scmp.le.s32.totalorder 1, %s21
      %p208 = scmp.lt.s32.totalorder %s21, 5
      %p209 = pnand %p207, %p208
      %p210 = pneg %p209
      // Predicated region
      $region9: #{action_scoring_forward.1} parent=5 // pred_check
        _
      $region10: #{action_scoring_forward.1} parent=5 // pred_check_branch
        %212 = sbr.rel (%p209) target = $region12
      $region11: #{action_scoring_forward.1} parent=5 // pred_region
        %s213 = ssub.s32 %s21, 1
        // Predicated region
        $region13: #{action_scoring_forward.1} parent=11 // pred_check
          %p214 = pneg %p68
        $region14: #{action_scoring_forward.1} parent=11 // pred_check_branch
          %216 = sbr.rel (%p214) target = $region16
        $region15: #{action_scoring_forward.1} parent=11 // pred_region
          _
        $region16: #{action_scoring_forward.1} parent=11 // pred_fallthru
          _
        // Predicated region
        $region17: #{action_scoring_forward.1} parent=11 // pred_check
          %p217 = pneg %p89
        $region18: #{action_scoring_forward.1} parent=11 // pred_check_branch
          %219 = sbr.rel (%p217) target = $region20
        $region19: #{action_scoring_forward.1} parent=11 // pred_region
          _
        $region20: #{action_scoring_forward.1} parent=11 // pred_fallthru
          _
        // Predicated region
        $region21: #{action_scoring_forward.1} parent=11 // pred_check
          %p220 = pneg %p110
        $region22: #{action_scoring_forward.1} parent=11 // pred_check_branch
          %222 = sbr.rel (%p220) target = $region24
        $region23: #{action_scoring_forward.1} parent=11 // pred_region
          _
        $region24: #{action_scoring_forward.1} parent=11 // pred_fallthru
          _
        // Predicated region
        $region25: #{action_scoring_forward.1} parent=11 // pred_check
          %p223 = pneg %p131
        $region26: #{action_scoring_forward.1} parent=11 // pred_check_branch
          %225 = sbr.rel (%p223) target = $region28
        $region27: #{action_scoring_forward.1} parent=11 // pred_region
          _
        $region28: #{action_scoring_forward.1} parent=11 // pred_fallthru
          _
        // Predicated region
        $region29: #{action_scoring_forward.1} parent=11 // pred_check
          %p226 = pneg %p152
        $region30: #{action_scoring_forward.1} parent=11 // pred_check_branch
          %228 = sbr.rel (%p226) target = $region32
        $region31: #{action_scoring_forward.1} parent=11 // pred_region
          _
        $region32: #{action_scoring_forward.1} parent=11 // pred_fallthru
          _
        // Predicated region
        $region33: #{action_scoring_forward.1} parent=11 // pred_check
          %p229 = pneg %p173
        $region34: #{action_scoring_forward.1} parent=11 // pred_check_branch
          %231 = sbr.rel (%p229) target = $region36
        $region35: #{action_scoring_forward.1} parent=11 // pred_region
          _
        $region36: #{action_scoring_forward.1} parent=11 // pred_fallthru
          _
      $region12: #{action_scoring_forward.1} parent=5 // pred_fallthru
        _
      %p232 = scmp.lt.s32.totalorder %s21, 4
      // Predicated region
      $region37: #{action_scoring_forward.1} parent=5 // pred_check
        %p233 = pneg %p232
      $region38: #{action_scoring_forward.1} parent=5 // pred_check_branch
        %235 = sbr.rel (%p233) target = $region40
      $region39: #{action_scoring_forward.1} parent=5 // pred_region
        // Predicated region
        $region41: #{action_scoring_forward.1} parent=39 // pred_check
          %p236 = pneg %p41
        $region42: #{action_scoring_forward.1} parent=39 // pred_check_branch
          %238 = sbr.rel (%p236) target = $region44
        $region43: #{action_scoring_forward.1} parent=39 // pred_region
          %s239 = sand.u32 %s31, 1
          %s240 = scalar_lea.sflag [#allocation4], %s239
          %s241 = sand.u32 %s31, 1
          %s242 = smul.addr %s241, 128
          %s243 = scalar_lea.vmem [#allocation3], %s242
          %s244 = smul.u32 4, %s21
          %246 = vsyncadd %s240, 0
          %s247 = smul.addr %s244, 8
          %s248 = scalar_lea.hbm %s0, %s247
          %s249 = sshll.u32 %s248, 4
          %s250 = int_to_ptr.hbm [resolvable:$true] %s249
          %s251 = sshll.u32 %s243, 4
          %s252 = int_to_ptr.vmem [resolvable:$true] %s251
          %257 = dma.hbm_to_vmem [thread:$0]  %s250, 2048, %s252, %s240, 2048, 512, 32
        $region44: #{action_scoring_forward.1} parent=39 // pred_fallthru
          _
      $region40: #{action_scoring_forward.1} parent=5 // pred_fallthru
        _
      %p258 = scmp.le.s32.totalorder 1, %s21
      %p259 = scmp.lt.s32.totalorder %s21, 5
      %p260 = pnand %p258, %p259
      %p261 = pneg %p260
      // Predicated region
      $region45: #{action_scoring_forward.1} parent=5 // pred_check
        _
      $region46: #{action_scoring_forward.1} parent=5 // pred_check_branch
        %263 = sbr.rel (%p260) target = $region48
      $region47: #{action_scoring_forward.1} parent=5 // pred_region
        %s264 = ssub.s32 %s21, 1
        %s265 = sand.u32 %s34, 1
        %s266 = scalar_lea.sflag [#allocation4], %s265
        %s267 = sand.u32 %s34, 1
        %s268 = smul.addr %s267, 128
        %s269 = scalar_lea.vmem [#allocation3], %s268
        // Predicated region
        $region49: #{action_scoring_forward.1} parent=47 // pred_check
          %p270 = pneg %p47
        $region50: #{action_scoring_forward.1} parent=47 // pred_check_branch
          %272 = sbr.rel (%p270) target = $region52
        $region51: #{action_scoring_forward.1} parent=47 // pred_region
          %274 = dma.done %s266, 2048
        $region52: #{action_scoring_forward.1} parent=47 // pred_fallthru
          _
        %s275 = sand.u32 %s34, 1
        %s276 = scalar_lea.sflag [#allocation4], %s275
        %s277 = sand.u32 %s34, 1
        %s278 = smul.addr %s277, 128
        %s279 = scalar_lea.vmem [#allocation3], %s278
        %p280 = pneg %p47
        %p281 = pneg %p44
        %p282 = pneg %p68
        %p283 = pneg %p65
        %p284 = pneg %p89
        %p285 = pneg %p86
        %p286 = pneg %p110
        %p287 = pneg %p107
        %p288 = pneg %p131
        %p289 = pneg %p128
        %p290 = pneg %p152
        %p291 = pneg %p149
        %p292 = pneg %p173
        %p293 = pneg %p170
        %p294 = pneg %p199
        %p295 = pneg %p196
        %s296 = sand.u32 %s186, 1
        %s297 = scalar_lea.sflag [#allocation5], %s296
        %s298 = sand.u32 %s186, 1
        %s299 = smul.addr %s298, 4
        %s300 = scalar_lea.vmem [#allocation6], %s299
        %s301 = smul.u32 4, %s26
        %s302 = smul.u32 4, %s26
        %v303 = vld [vmem:[%s269] sm:$0xff]
        %v304 = vld [vmem:[%s269 + $0x8] sm:$0xff]
        %v305 = vld [vmem:[%s269 + $0x10] sm:$0xff]
        %v306 = vld [vmem:[%s269 + $0x18] sm:$0xff]
        %v307 = vld [vmem:[%s269 + $0x20] sm:$0xff]
        %v308 = vld [vmem:[%s269 + $0x28] sm:$0xff]
        %v309 = vld [vmem:[%s269 + $0x30] sm:$0xff]
        %v310 = vld [vmem:[%s269 + $0x38] sm:$0xff]
        %v311 = vld [vmem:[%s269 + $0x40] sm:$0xff]
        %v312 = vld [vmem:[%s269 + $0x48] sm:$0xff]
        %v313 = vld [vmem:[%s269 + $0x50] sm:$0xff]
        %v314 = vld [vmem:[%s269 + $0x58] sm:$0xff]
        %v315 = vld [vmem:[%s269 + $0x60] sm:$0xff]
        %v316 = vld [vmem:[%s269 + $0x68] sm:$0xff]
        %v317 = vld [vmem:[%s269 + $0x70] sm:$0xff]
        %v318 = vld [vmem:[%s269 + $0x78] sm:$0xff]
        %v319 = vld [vmem:[%s1] sm:$0xff]
        %v320 = vld [vmem:[%s1 + $0x8] sm:$0xff]
        %v321 = vld [vmem:[%s1 + $0x10] sm:$0xff]
        %v322 = vld [vmem:[%s1 + $0x18] sm:$0xff]
        %v323 = vld [vmem:[%s1 + $0x20] sm:$0xff]
        %v324 = vld [vmem:[%s1 + $0x28] sm:$0xff]
        %v325 = vld [vmem:[%s1 + $0x30] sm:$0xff]
        %v326 = vld [vmem:[%s1 + $0x38] sm:$0xff]
        %v327 = vld [vmem:[%s2] sm:$0xff]
        %v328 = vld [vmem:[%s2 + $0x8] sm:$0xff]
        %v329 = vld [vmem:[%s2 + $0x10] sm:$0xff]
        %v330 = vld [vmem:[%s2 + $0x18] sm:$0xff]
        %v331 = vld [vmem:[%s2 + $0x20] sm:$0xff]
        %v332 = vld [vmem:[%s2 + $0x28] sm:$0xff]
        %v333 = vld [vmem:[%s2 + $0x30] sm:$0xff]
        %v334 = vld [vmem:[%s2 + $0x38] sm:$0xff]
        %336 = vset.pattern.permute.xlu0 0
        %337 = vperm.xlu0 %336, %v327
        %v338 = vpop.permute.xlu0 %337
        %341 = vset.pattern.permute.xlu0 0
        %342 = vperm.xlu0 %341, %v328
        %v343 = vpop.permute.xlu0 %342
        %346 = vset.pattern.permute.xlu0 0
        %347 = vperm.xlu0 %346, %v329
        %v348 = vpop.permute.xlu0 %347
        %351 = vset.pattern.permute.xlu0 0
        %352 = vperm.xlu0 %351, %v330
        %v353 = vpop.permute.xlu0 %352
        %356 = vset.pattern.permute.xlu0 0
        %357 = vperm.xlu0 %356, %v331
        %v358 = vpop.permute.xlu0 %357
        %361 = vset.pattern.permute.xlu0 0
        %362 = vperm.xlu0 %361, %v332
        %v363 = vpop.permute.xlu0 %362
        %366 = vset.pattern.permute.xlu0 0
        %367 = vperm.xlu0 %366, %v333
        %v368 = vpop.permute.xlu0 %367
        %371 = vset.pattern.permute.xlu0 0
        %372 = vperm.xlu0 %371, %v334
        %v373 = vpop.permute.xlu0 %372
        %vm375 = vcmask 261120
        %v377 = vsel %vm375, %v319, 0
        %v380 = vsel %vm375, %v320, 0
        %v383 = vsel %vm375, %v321, 0
        %v386 = vsel %vm375, %v322, 0
        %v389 = vsel %vm375, %v323, 0
        %v392 = vsel %vm375, %v324, 0
        %v395 = vsel %vm375, %v325, 0
        %v398 = vsel %vm375, %v326, 0
        %400 = vmatpush.msra.mxu0 0.0
        %401 = vmatpush.msra.mxu0 0.0
        %402 = vmatpush.msra.mxu0 0.0
        %403 = vmatpush.msra.mxu0 0.0
        %404 = vmatpush.msra.mxu0 0.0
        %405 = vmatpush.msra.mxu0 0.0
        %406 = vmatpush.msra.mxu0 0.0
        %407 = vmatpush.msra.mxu0 0.0
        %408 = vmatpush.msra.mxu0 0.0
        %409 = vmatpush.msra.mxu0 0.0
        %410 = vmatpush.msra.mxu0 0.0
        %411 = vmatpush.msra.mxu0 0.0
        %412 = vmatpush.msra.mxu0 %v315
        %413 = vmatpush.msra.mxu0 %v311
        %414 = vmatpush.msra.mxu0 %v307
        %415 = vmatpush.msra.mxu0 %v303
        %416 = vmatmul.f32.gmra.mxu0 %v377
        %v417 = vpop.f32.mrf.mxu0
        %v418 = vadd.f32 %v338, %v417
        %419 = vmatmul.f32.gmra.mxu0 %v380
        %v420 = vpop.f32.mrf.mxu0
        %v421 = vadd.f32 %v343, %v420
        %422 = vmatmul.f32.gmra.mxu0 %v383
        %v423 = vpop.f32.mrf.mxu0
        %v424 = vadd.f32 %v348, %v423
        %425 = vmatmul.f32.gmra.mxu0 %v386
        %v426 = vpop.f32.mrf.mxu0
        %v427 = vadd.f32 %v353, %v426
        %428 = vmatmul.f32.gmra.mxu0 %v389
        %v429 = vpop.f32.mrf.mxu0
        %v430 = vadd.f32 %v358, %v429
        %431 = vmatmul.f32.gmra.mxu0 %v392
        %v432 = vpop.f32.mrf.mxu0
        %v433 = vadd.f32 %v363, %v432
        %434 = vmatmul.f32.gmra.mxu0 %v395
        %v435 = vpop.f32.mrf.mxu0
        %v436 = vadd.f32 %v368, %v435
        %437 = vmatmul.f32.gmra.mxu0 %v398
        %v438 = vpop.f32.mrf.mxu0
        %v439 = vadd.f32 %v373, %v438
        %440 = vdwg.mxu0
        %441 = vmatpush.msra.mxu0 0.0
        %442 = vmatpush.msra.mxu0 0.0
        %443 = vmatpush.msra.mxu0 0.0
        %444 = vmatpush.msra.mxu0 0.0
        %445 = vmatpush.msra.mxu0 0.0
        %446 = vmatpush.msra.mxu0 0.0
        %447 = vmatpush.msra.mxu0 0.0
        %448 = vmatpush.msra.mxu0 0.0
        %449 = vmatpush.msra.mxu0 0.0
        %450 = vmatpush.msra.mxu0 0.0
        %451 = vmatpush.msra.mxu0 0.0
        %452 = vmatpush.msra.mxu0 0.0
        %453 = vmatpush.msra.mxu0 %v316
        %454 = vmatpush.msra.mxu0 %v312
        %455 = vmatpush.msra.mxu0 %v308
        %456 = vmatpush.msra.mxu0 %v304
        %457 = vmatmul.f32.gmra.mxu0 %v377
        %v458 = vpop.f32.mrf.mxu0
        %v459 = vadd.f32 %v338, %v458
        %460 = vmatmul.f32.gmra.mxu0 %v380
        %v461 = vpop.f32.mrf.mxu0
        %v462 = vadd.f32 %v343, %v461
        %463 = vmatmul.f32.gmra.mxu0 %v383
        %v464 = vpop.f32.mrf.mxu0
        %v465 = vadd.f32 %v348, %v464
        %466 = vmatmul.f32.gmra.mxu0 %v386
        %v467 = vpop.f32.mrf.mxu0
        %v468 = vadd.f32 %v353, %v467
        %469 = vmatmul.f32.gmra.mxu0 %v389
        %v470 = vpop.f32.mrf.mxu0
        %v471 = vadd.f32 %v358, %v470
        %472 = vmatmul.f32.gmra.mxu0 %v392
        %v473 = vpop.f32.mrf.mxu0
        %v474 = vadd.f32 %v363, %v473
        %475 = vmatmul.f32.gmra.mxu0 %v395
        %v476 = vpop.f32.mrf.mxu0
        %v477 = vadd.f32 %v368, %v476
        %478 = vmatmul.f32.gmra.mxu0 %v398
        %v479 = vpop.f32.mrf.mxu0
        %v480 = vadd.f32 %v373, %v479
        %481 = vdwg.mxu0
        %482 = vmatpush.msra.mxu0 0.0
        %483 = vmatpush.msra.mxu0 0.0
        %484 = vmatpush.msra.mxu0 0.0
        %485 = vmatpush.msra.mxu0 0.0
        %486 = vmatpush.msra.mxu0 0.0
        %487 = vmatpush.msra.mxu0 0.0
        %488 = vmatpush.msra.mxu0 0.0
        %489 = vmatpush.msra.mxu0 0.0
        %490 = vmatpush.msra.mxu0 0.0
        %491 = vmatpush.msra.mxu0 0.0
        %492 = vmatpush.msra.mxu0 0.0
        %493 = vmatpush.msra.mxu0 0.0
        %494 = vmatpush.msra.mxu0 %v317
        %495 = vmatpush.msra.mxu0 %v313
        %496 = vmatpush.msra.mxu0 %v309
        %497 = vmatpush.msra.mxu0 %v305
        %498 = vmatmul.f32.gmra.mxu0 %v377
        %v499 = vpop.f32.mrf.mxu0
        %v500 = vadd.f32 %v338, %v499
        %501 = vmatmul.f32.gmra.mxu0 %v380
        %v502 = vpop.f32.mrf.mxu0
        %v503 = vadd.f32 %v343, %v502
        %504 = vmatmul.f32.gmra.mxu0 %v383
        %v505 = vpop.f32.mrf.mxu0
        %v506 = vadd.f32 %v348, %v505
        %507 = vmatmul.f32.gmra.mxu0 %v386
        %v508 = vpop.f32.mrf.mxu0
        %v509 = vadd.f32 %v353, %v508
        %510 = vmatmul.f32.gmra.mxu0 %v389
        %v511 = vpop.f32.mrf.mxu0
        %v512 = vadd.f32 %v358, %v511
        %513 = vmatmul.f32.gmra.mxu0 %v392
        %v514 = vpop.f32.mrf.mxu0
        %v515 = vadd.f32 %v363, %v514
        %516 = vmatmul.f32.gmra.mxu0 %v395
        %v517 = vpop.f32.mrf.mxu0
        %v518 = vadd.f32 %v368, %v517
        %519 = vmatmul.f32.gmra.mxu0 %v398
        %v520 = vpop.f32.mrf.mxu0
        %v521 = vadd.f32 %v373, %v520
        %522 = vdwg.mxu0
        %523 = vmatpush.msra.mxu0 0.0
        %524 = vmatpush.msra.mxu0 0.0
        %525 = vmatpush.msra.mxu0 0.0
        %526 = vmatpush.msra.mxu0 0.0
        %527 = vmatpush.msra.mxu0 0.0
        %528 = vmatpush.msra.mxu0 0.0
        %529 = vmatpush.msra.mxu0 0.0
        %530 = vmatpush.msra.mxu0 0.0
        %531 = vmatpush.msra.mxu0 0.0
        %532 = vmatpush.msra.mxu0 0.0
        %533 = vmatpush.msra.mxu0 0.0
        %534 = vmatpush.msra.mxu0 0.0
        %535 = vmatpush.msra.mxu0 %v318
        %536 = vmatpush.msra.mxu0 %v314
        %537 = vmatpush.msra.mxu0 %v310
        %538 = vmatpush.msra.mxu0 %v306
        %539 = vmatmul.f32.gmra.mxu0 %v377
        %v540 = vpop.f32.mrf.mxu0
        %v541 = vadd.f32 %v338, %v540
        %542 = vmatmul.f32.gmra.mxu0 %v380
        %v543 = vpop.f32.mrf.mxu0
        %v544 = vadd.f32 %v343, %v543
        %545 = vmatmul.f32.gmra.mxu0 %v383
        %v546 = vpop.f32.mrf.mxu0
        %v547 = vadd.f32 %v348, %v546
        %548 = vmatmul.f32.gmra.mxu0 %v386
        %v549 = vpop.f32.mrf.mxu0
        %v550 = vadd.f32 %v353, %v549
        %551 = vmatmul.f32.gmra.mxu0 %v389
        %v552 = vpop.f32.mrf.mxu0
        %v553 = vadd.f32 %v358, %v552
        %554 = vmatmul.f32.gmra.mxu0 %v392
        %v555 = vpop.f32.mrf.mxu0
        %v556 = vadd.f32 %v363, %v555
        %557 = vmatmul.f32.gmra.mxu0 %v395
        %v558 = vpop.f32.mrf.mxu0
        %v559 = vadd.f32 %v368, %v558
        %560 = vmatmul.f32.gmra.mxu0 %v398
        %v561 = vpop.f32.mrf.mxu0
        %v562 = vadd.f32 %v373, %v561
        %563 = vdwg.mxu0
        %v564 = vmax.f32 %v418, 0.0
        %v565 = vmax.f32 %v459, 0.0
        %v566 = vmax.f32 %v500, 0.0
        %v567 = vmax.f32 %v541, 0.0
        %v568 = vmax.f32 %v421, 0.0
        %v569 = vmax.f32 %v462, 0.0
        %v570 = vmax.f32 %v503, 0.0
        %v571 = vmax.f32 %v544, 0.0
        %v572 = vmax.f32 %v424, 0.0
        %v573 = vmax.f32 %v465, 0.0
        %v574 = vmax.f32 %v506, 0.0
        %v575 = vmax.f32 %v547, 0.0
        %v576 = vmax.f32 %v427, 0.0
        %v577 = vmax.f32 %v468, 0.0
        %v578 = vmax.f32 %v509, 0.0
        %v579 = vmax.f32 %v550, 0.0
        %v580 = vmax.f32 %v430, 0.0
        %v581 = vmax.f32 %v471, 0.0
        %v582 = vmax.f32 %v512, 0.0
        %v583 = vmax.f32 %v553, 0.0
        %v584 = vmax.f32 %v433, 0.0
        %v585 = vmax.f32 %v474, 0.0
        %v586 = vmax.f32 %v515, 0.0
        %v587 = vmax.f32 %v556, 0.0
        %v588 = vmax.f32 %v436, 0.0
        %v589 = vmax.f32 %v477, 0.0
        %v590 = vmax.f32 %v518, 0.0
        %v591 = vmax.f32 %v559, 0.0
        %v592 = vmax.f32 %v439, 0.0
        %v593 = vmax.f32 %v480, 0.0
        %v594 = vmax.f32 %v521, 0.0
        %v595 = vmax.f32 %v562, 0.0
        %v596 = vld [vmem:[%s3] sm:$0xff]
        %v597 = vld [vmem:[%s3 + $0x8] sm:$0xff]
        %v598 = vld [vmem:[%s3 + $0x10] sm:$0xff]
        %v599 = vld [vmem:[%s3 + $0x18] sm:$0xff]
        %v600 = vld [vmem:[%s3 + $0x20] sm:$0xff]
        %v601 = vld [vmem:[%s3 + $0x28] sm:$0xff]
        %v602 = vld [vmem:[%s3 + $0x30] sm:$0xff]
        %v603 = vld [vmem:[%s3 + $0x38] sm:$0xff]
        %v604 = vld [vmem:[%s4] sm:$0xff]
        %v605 = vld [vmem:[%s4 + $0x8] sm:$0xff]
        %v606 = vld [vmem:[%s4 + $0x10] sm:$0xff]
        %v607 = vld [vmem:[%s4 + $0x18] sm:$0xff]
        %v608 = vld [vmem:[%s4 + $0x20] sm:$0xff]
        %v609 = vld [vmem:[%s4 + $0x28] sm:$0xff]
        %v610 = vld [vmem:[%s4 + $0x30] sm:$0xff]
        %v611 = vld [vmem:[%s4 + $0x38] sm:$0xff]
        %613 = vset.pattern.permute.xlu0 0
        %614 = vperm.xlu0 %613, %v604
        %v615 = vpop.permute.xlu0 %614
        %618 = vset.pattern.permute.xlu0 0
        %619 = vperm.xlu0 %618, %v605
        %v620 = vpop.permute.xlu0 %619
        %623 = vset.pattern.permute.xlu0 0
        %624 = vperm.xlu0 %623, %v606
        %v625 = vpop.permute.xlu0 %624
        %628 = vset.pattern.permute.xlu0 0
        %629 = vperm.xlu0 %628, %v607
        %v630 = vpop.permute.xlu0 %629
        %633 = vset.pattern.permute.xlu0 0
        %634 = vperm.xlu0 %633, %v608
        %v635 = vpop.permute.xlu0 %634
        %638 = vset.pattern.permute.xlu0 0
        %639 = vperm.xlu0 %638, %v609
        %v640 = vpop.permute.xlu0 %639
        %643 = vset.pattern.permute.xlu0 0
        %644 = vperm.xlu0 %643, %v610
        %v645 = vpop.permute.xlu0 %644
        %648 = vset.pattern.permute.xlu0 0
        %649 = vperm.xlu0 %648, %v611
        %v650 = vpop.permute.xlu0 %649
        %vm652 = vcmask 523264
        %v654 = vsel %vm652, %v596, 0
        %v657 = vsel %vm652, %v597, 0
        %v660 = vsel %vm652, %v598, 0
        %v663 = vsel %vm652, %v599, 0
        %v666 = vsel %vm652, %v600, 0
        %v669 = vsel %vm652, %v601, 0
        %v672 = vsel %vm652, %v602, 0
        %v675 = vsel %vm652, %v603, 0
        %677 = vmatpush.msra.mxu0 0.0
        %678 = vmatpush.msra.mxu0 0.0
        %679 = vmatpush.msra.mxu0 0.0
        %680 = vmatpush.msra.mxu0 0.0
        %681 = vmatpush.msra.mxu0 0.0
        %682 = vmatpush.msra.mxu0 0.0
        %683 = vmatpush.msra.mxu0 0.0
        %684 = vmatpush.msra.mxu0 0.0
        %685 = vmatpush.msra.mxu0 %v592
        %686 = vmatpush.msra.mxu0 %v588
        %687 = vmatpush.msra.mxu0 %v584
        %688 = vmatpush.msra.mxu0 %v580
        %689 = vmatpush.msra.mxu0 %v576
        %690 = vmatpush.msra.mxu0 %v572
        %691 = vmatpush.msra.mxu0 %v568
        %692 = vmatpush.msra.mxu0 %v564
        %693 = vmatmul.f32.gmra.mxu0 %v654
        %v694 = vpop.f32.mrf.mxu0
        %v695 = vadd.f32 %v615, %v694
        %696 = vmatmul.f32.gmra.mxu0 %v657
        %v697 = vpop.f32.mrf.mxu0
        %v698 = vadd.f32 %v620, %v697
        %699 = vmatmul.f32.gmra.mxu0 %v660
        %v700 = vpop.f32.mrf.mxu0
        %v701 = vadd.f32 %v625, %v700
        %702 = vmatmul.f32.gmra.mxu0 %v663
        %v703 = vpop.f32.mrf.mxu0
        %v704 = vadd.f32 %v630, %v703
        %705 = vmatmul.f32.gmra.mxu0 %v666
        %v706 = vpop.f32.mrf.mxu0
        %v707 = vadd.f32 %v635, %v706
        %708 = vmatmul.f32.gmra.mxu0 %v669
        %v709 = vpop.f32.mrf.mxu0
        %v710 = vadd.f32 %v640, %v709
        %711 = vmatmul.f32.gmra.mxu0 %v672
        %v712 = vpop.f32.mrf.mxu0
        %v713 = vadd.f32 %v645, %v712
        %714 = vmatmul.f32.gmra.mxu0 %v675
        %v715 = vpop.f32.mrf.mxu0
        %v716 = vadd.f32 %v650, %v715
        %717 = vdwg.mxu0
        %718 = vmatpush.msra.mxu0 0.0
        %719 = vmatpush.msra.mxu0 0.0
        %720 = vmatpush.msra.mxu0 0.0
        %721 = vmatpush.msra.mxu0 0.0
        %722 = vmatpush.msra.mxu0 0.0
        %723 = vmatpush.msra.mxu0 0.0
        %724 = vmatpush.msra.mxu0 0.0
        %725 = vmatpush.msra.mxu0 0.0
        %726 = vmatpush.msra.mxu0 %v593
        %727 = vmatpush.msra.mxu0 %v589
        %728 = vmatpush.msra.mxu0 %v585
        %729 = vmatpush.msra.mxu0 %v581
        %730 = vmatpush.msra.mxu0 %v577
        %731 = vmatpush.msra.mxu0 %v573
        %732 = vmatpush.msra.mxu0 %v569
        %733 = vmatpush.msra.mxu0 %v565
        %734 = vmatmul.f32.gmra.mxu0 %v654
        %v735 = vpop.f32.mrf.mxu0
        %v736 = vadd.f32 %v615, %v735
        %737 = vmatmul.f32.gmra.mxu0 %v657
        %v738 = vpop.f32.mrf.mxu0
        %v739 = vadd.f32 %v620, %v738
        %740 = vmatmul.f32.gmra.mxu0 %v660
        %v741 = vpop.f32.mrf.mxu0
        %v742 = vadd.f32 %v625, %v741
        %743 = vmatmul.f32.gmra.mxu0 %v663
        %v744 = vpop.f32.mrf.mxu0
        %v745 = vadd.f32 %v630, %v744
        %746 = vmatmul.f32.gmra.mxu0 %v666
        %v747 = vpop.f32.mrf.mxu0
        %v748 = vadd.f32 %v635, %v747
        %749 = vmatmul.f32.gmra.mxu0 %v669
        %v750 = vpop.f32.mrf.mxu0
        %v751 = vadd.f32 %v640, %v750
        %752 = vmatmul.f32.gmra.mxu0 %v672
        %v753 = vpop.f32.mrf.mxu0
        %v754 = vadd.f32 %v645, %v753
        %755 = vmatmul.f32.gmra.mxu0 %v675
        %v756 = vpop.f32.mrf.mxu0
        %v757 = vadd.f32 %v650, %v756
        %758 = vdwg.mxu0
        %759 = vmatpush.msra.mxu0 0.0
        %760 = vmatpush.msra.mxu0 0.0
        %761 = vmatpush.msra.mxu0 0.0
        %762 = vmatpush.msra.mxu0 0.0
        %763 = vmatpush.msra.mxu0 0.0
        %764 = vmatpush.msra.mxu0 0.0
        %765 = vmatpush.msra.mxu0 0.0
        %766 = vmatpush.msra.mxu0 0.0
        %767 = vmatpush.msra.mxu0 %v594
        %768 = vmatpush.msra.mxu0 %v590
        %769 = vmatpush.msra.mxu0 %v586
        %770 = vmatpush.msra.mxu0 %v582
        %771 = vmatpush.msra.mxu0 %v578
        %772 = vmatpush.msra.mxu0 %v574
        %773 = vmatpush.msra.mxu0 %v570
        %774 = vmatpush.msra.mxu0 %v566
        %775 = vmatmul.f32.gmra.mxu0 %v654
        %v776 = vpop.f32.mrf.mxu0
        %v777 = vadd.f32 %v615, %v776
        %778 = vmatmul.f32.gmra.mxu0 %v657
        %v779 = vpop.f32.mrf.mxu0
        %v780 = vadd.f32 %v620, %v779
        %781 = vmatmul.f32.gmra.mxu0 %v660
        %v782 = vpop.f32.mrf.mxu0
        %v783 = vadd.f32 %v625, %v782
        %784 = vmatmul.f32.gmra.mxu0 %v663
        %v785 = vpop.f32.mrf.mxu0
        %v786 = vadd.f32 %v630, %v785
        %787 = vmatmul.f32.gmra.mxu0 %v666
        %v788 = vpop.f32.mrf.mxu0
        %v789 = vadd.f32 %v635, %v788
        %790 = vmatmul.f32.gmra.mxu0 %v669
        %v791 = vpop.f32.mrf.mxu0
        %v792 = vadd.f32 %v640, %v791
        %793 = vmatmul.f32.gmra.mxu0 %v672
        %v794 = vpop.f32.mrf.mxu0
        %v795 = vadd.f32 %v645, %v794
        %796 = vmatmul.f32.gmra.mxu0 %v675
        %v797 = vpop.f32.mrf.mxu0
        %v798 = vadd.f32 %v650, %v797
        %799 = vdwg.mxu0
        %800 = vmatpush.msra.mxu0 0.0
        %801 = vmatpush.msra.mxu0 0.0
        %802 = vmatpush.msra.mxu0 0.0
        %803 = vmatpush.msra.mxu0 0.0
        %804 = vmatpush.msra.mxu0 0.0
        %805 = vmatpush.msra.mxu0 0.0
        %806 = vmatpush.msra.mxu0 0.0
        %807 = vmatpush.msra.mxu0 0.0
        %808 = vmatpush.msra.mxu0 %v595
        %809 = vmatpush.msra.mxu0 %v591
        %810 = vmatpush.msra.mxu0 %v587
        %811 = vmatpush.msra.mxu0 %v583
        %812 = vmatpush.msra.mxu0 %v579
        %813 = vmatpush.msra.mxu0 %v575
        %814 = vmatpush.msra.mxu0 %v571
        %815 = vmatpush.msra.mxu0 %v567
        %816 = vmatmul.f32.gmra.mxu0 %v654
        %v817 = vpop.f32.mrf.mxu0
        %v818 = vadd.f32 %v615, %v817
        %819 = vmatmul.f32.gmra.mxu0 %v657
        %v820 = vpop.f32.mrf.mxu0
        %v821 = vadd.f32 %v620, %v820
        %822 = vmatmul.f32.gmra.mxu0 %v660
        %v823 = vpop.f32.mrf.mxu0
        %v824 = vadd.f32 %v625, %v823
        %825 = vmatmul.f32.gmra.mxu0 %v663
        %v826 = vpop.f32.mrf.mxu0
        %v827 = vadd.f32 %v630, %v826
        %828 = vmatmul.f32.gmra.mxu0 %v666
        %v829 = vpop.f32.mrf.mxu0
        %v830 = vadd.f32 %v635, %v829
        %831 = vmatmul.f32.gmra.mxu0 %v669
        %v832 = vpop.f32.mrf.mxu0
        %v833 = vadd.f32 %v640, %v832
        %834 = vmatmul.f32.gmra.mxu0 %v672
        %v835 = vpop.f32.mrf.mxu0
        %v836 = vadd.f32 %v645, %v835
        %837 = vmatmul.f32.gmra.mxu0 %v675
        %v838 = vpop.f32.mrf.mxu0
        %v839 = vadd.f32 %v650, %v838
        %840 = vdwg.mxu0
        %v841 = vmax.f32 %v695, 0.0
        %v842 = vmax.f32 %v736, 0.0
        %v843 = vmax.f32 %v777, 0.0
        %v844 = vmax.f32 %v818, 0.0
        %v845 = vmax.f32 %v698, 0.0
        %v846 = vmax.f32 %v739, 0.0
        %v847 = vmax.f32 %v780, 0.0
        %v848 = vmax.f32 %v821, 0.0
        %v849 = vmax.f32 %v701, 0.0
        %v850 = vmax.f32 %v742, 0.0
        %v851 = vmax.f32 %v783, 0.0
        %v852 = vmax.f32 %v824, 0.0
        %v853 = vmax.f32 %v704, 0.0
        %v854 = vmax.f32 %v745, 0.0
        %v855 = vmax.f32 %v786, 0.0
        %v856 = vmax.f32 %v827, 0.0
        %v857 = vmax.f32 %v707, 0.0
        %v858 = vmax.f32 %v748, 0.0
        %v859 = vmax.f32 %v789, 0.0
        %v860 = vmax.f32 %v830, 0.0
        %v861 = vmax.f32 %v710, 0.0
        %v862 = vmax.f32 %v751, 0.0
        %v863 = vmax.f32 %v792, 0.0
        %v864 = vmax.f32 %v833, 0.0
        %v865 = vmax.f32 %v713, 0.0
        %v866 = vmax.f32 %v754, 0.0
        %v867 = vmax.f32 %v795, 0.0
        %v868 = vmax.f32 %v836, 0.0
        %v869 = vmax.f32 %v716, 0.0
        %v870 = vmax.f32 %v757, 0.0
        %v871 = vmax.f32 %v798, 0.0
        %v872 = vmax.f32 %v839, 0.0
        %v873 = vld [vmem:[%s5] sm:$0xff]
        %v874 = vld [vmem:[%s5 + $0x8] sm:$0xff]
        %v875 = vld [vmem:[%s5 + $0x10] sm:$0xff]
        %v876 = vld [vmem:[%s5 + $0x18] sm:$0xff]
        %v877 = vld [vmem:[%s5 + $0x20] sm:$0xff]
        %v878 = vld [vmem:[%s5 + $0x28] sm:$0xff]
        %v879 = vld [vmem:[%s5 + $0x30] sm:$0xff]
        %v880 = vld [vmem:[%s5 + $0x38] sm:$0xff]
        %882 = vset.pattern.permute.xlu0 0
        %883 = vperm.xlu0 %882, %v873
        %v884 = vpop.permute.xlu0 %883
        %887 = vset.pattern.permute.xlu0 0
        %888 = vperm.xlu0 %887, %v874
        %v889 = vpop.permute.xlu0 %888
        %892 = vset.pattern.permute.xlu0 0
        %893 = vperm.xlu0 %892, %v875
        %v894 = vpop.permute.xlu0 %893
        %897 = vset.pattern.permute.xlu0 0
        %898 = vperm.xlu0 %897, %v876
        %v899 = vpop.permute.xlu0 %898
        %902 = vset.pattern.permute.xlu0 0
        %903 = vperm.xlu0 %902, %v877
        %v904 = vpop.permute.xlu0 %903
        %907 = vset.pattern.permute.xlu0 0
        %908 = vperm.xlu0 %907, %v878
        %v909 = vpop.permute.xlu0 %908
        %912 = vset.pattern.permute.xlu0 0
        %913 = vperm.xlu0 %912, %v879
        %v914 = vpop.permute.xlu0 %913
        %917 = vset.pattern.permute.xlu0 0
        %918 = vperm.xlu0 %917, %v880
        %v919 = vpop.permute.xlu0 %918
        %v921 = vmul.f32 %v841, %v884
        %v922 = vmul.f32 %v842, %v884
        %v923 = vmul.f32 %v843, %v884
        %v924 = vmul.f32 %v844, %v884
        %v925 = vmul.f32 %v845, %v889
        %v926 = vmul.f32 %v846, %v889
        %v927 = vmul.f32 %v847, %v889
        %v928 = vmul.f32 %v848, %v889
        %v929 = vmul.f32 %v849, %v894
        %v930 = vmul.f32 %v850, %v894
        %v931 = vmul.f32 %v851, %v894
        %v932 = vmul.f32 %v852, %v894
        %v933 = vmul.f32 %v853, %v899
        %v934 = vmul.f32 %v854, %v899
        %v935 = vmul.f32 %v855, %v899
        %v936 = vmul.f32 %v856, %v899
        %v937 = vmul.f32 %v857, %v904
        %v938 = vmul.f32 %v858, %v904
        %v939 = vmul.f32 %v859, %v904
        %v940 = vmul.f32 %v860, %v904
        %v941 = vmul.f32 %v861, %v909
        %v942 = vmul.f32 %v862, %v909
        %v943 = vmul.f32 %v863, %v909
        %v944 = vmul.f32 %v864, %v909
        %v945 = vmul.f32 %v865, %v914
        %v946 = vmul.f32 %v866, %v914
        %v947 = vmul.f32 %v867, %v914
        %v948 = vmul.f32 %v868, %v914
        %v949 = vmul.f32 %v869, %v919
        %v950 = vmul.f32 %v870, %v919
        %v951 = vmul.f32 %v871, %v919
        %v952 = vmul.f32 %v872, %v919
        %v953 = vadd.f32 %v921, %v925
        %v954 = vadd.f32 %v953, %v929
        %v955 = vadd.f32 %v954, %v933
        %v956 = vadd.f32 %v955, %v937
        %v957 = vadd.f32 %v956, %v941
        %v958 = vadd.f32 %v957, %v945
        %v959 = vadd.f32 %v958, %v949
        %v960 = vrot.slane %v959, 4
        %v961 = vadd.f32 %v959, %v960
        %v962 = vrot.slane %v961, 2
        %v963 = vadd.f32 %v961, %v962
        %v964 = vrot.slane %v963, 1
        %v965 = vadd.f32 %v963, %v964
        %v966 = vadd.f32 %v922, %v926
        %v967 = vadd.f32 %v966, %v930
        %v968 = vadd.f32 %v967, %v934
        %v969 = vadd.f32 %v968, %v938
        %v970 = vadd.f32 %v969, %v942
        %v971 = vadd.f32 %v970, %v946
        %v972 = vadd.f32 %v971, %v950
        %v973 = vrot.slane %v972, 4
        %v974 = vadd.f32 %v972, %v973
        %v975 = vrot.slane %v974, 2
        %v976 = vadd.f32 %v974, %v975
        %v977 = vrot.slane %v976, 1
        %v978 = vadd.f32 %v976, %v977
        %v979 = vadd.f32 %v923, %v927
        %v980 = vadd.f32 %v979, %v931
        %v981 = vadd.f32 %v980, %v935
        %v982 = vadd.f32 %v981, %v939
        %v983 = vadd.f32 %v982, %v943
        %v984 = vadd.f32 %v983, %v947
        %v985 = vadd.f32 %v984, %v951
        %v986 = vrot.slane %v985, 4
        %v987 = vadd.f32 %v985, %v986
        %v988 = vrot.slane %v987, 2
        %v989 = vadd.f32 %v987, %v988
        %v990 = vrot.slane %v989, 1
        %v991 = vadd.f32 %v989, %v990
        %v992 = vadd.f32 %v924, %v928
        %v993 = vadd.f32 %v992, %v932
        %v994 = vadd.f32 %v993, %v936
        %v995 = vadd.f32 %v994, %v940
        %v996 = vadd.f32 %v995, %v944
        %v997 = vadd.f32 %v996, %v948
        %v998 = vadd.f32 %v997, %v952
        %v999 = vrot.slane %v998, 4
        %v1000 = vadd.f32 %v998, %v999
        %v1001 = vrot.slane %v1000, 2
        %v1002 = vadd.f32 %v1000, %v1001
        %v1003 = vrot.slane %v1002, 1
        %v1004 = vadd.f32 %v1002, %v1003
        %v1005 = vld [vmem:[#allocation2] sm:$0x1]
        %1007 = vset.pattern.permute.xlu0 0
        %1008 = vperm.xlu0 %1007, %v1005
        %v1009 = vpop.permute.xlu0 %1008
        %v1011 = vperm.slane %v1009, 0
        %v1012 = vadd.f32 %v965, %v1011
        %v1013 = vadd.f32 %v978, %v1011
        %v1014 = vadd.f32 %v991, %v1011
        %v1015 = vadd.f32 %v1004, %v1011
        %v1020 = vrot.slane %v1013, 7
        %v1021 = vrot.slane %v1014, 6
        %v1022 = vrot.slane %v1015, 5
        %vm1023 = vcmask 1040384
        %v1024 = vsel %vm1023, %v1012, %v1020
        %vm1025 = vcmask 1042434
        %v1026 = vsel %vm1025, %v1021, %v1022
        %vm1027 = vcmask 1041408
        %v1028 = vsel %vm1027, %v1024, %v1026
        %v1030 = vlaneseq
        %vm1031 = vcmp.ge.s32.totalorder %v1030, 0
        %vm1032 = vcmp.lt.s32.totalorder %v1030, 512
        %vm1033 = vmand %vm1031, %vm1032
        %1034 = vst.msk [vmem:[%s300] sm:$0xf] %vm1033, %v1028
        %s1035 = sand.u32 %s186, 1
        %s1036 = scalar_lea.sflag [#allocation5], %s1035
        %s1037 = sand.u32 %s186, 1
        %s1038 = smul.addr %s1037, 4
        %s1039 = scalar_lea.vmem [#allocation6], %s1038
        // Predicated region
        $region53: #{action_scoring_forward.1} parent=47 // pred_check
          %p1040 = pneg %p196
        $region54: #{action_scoring_forward.1} parent=47 // pred_check_branch
          %1042 = sbr.rel (%p1040) target = $region56
        $region55: #{action_scoring_forward.1} parent=47 // pred_region
          %s1043 = smul.u32 4, %s26
          %1045 = vsyncadd %s1036, 0
          %s1046 = scalar_lea.hbm %s7, %s1043
          %s1048 = sshll.u32 %s1039, 4
          %s1049 = int_to_ptr.vmem [resolvable:$true] %s1048
          %s1050 = sshll.u32 %s1046, 4
          %s1051 = int_to_ptr.hbm [resolvable:$true] %s1050
          %1053 = dma.vmem_to_hbm [thread:$0]  %s1049, 64, %s1051, %s1036
        $region56: #{action_scoring_forward.1} parent=47 // pred_fallthru
          _
      $region48: #{action_scoring_forward.1} parent=5 // pred_fallthru
        _
      %p1054 = scmp.le.s32.totalorder 2, %s21
      // Predicated region
      $region57: #{action_scoring_forward.1} parent=5 // pred_check
        %p1055 = pneg %p1054
      $region58: #{action_scoring_forward.1} parent=5 // pred_check_branch
        %1057 = sbr.rel (%p1055) target = $region60
      $region59: #{action_scoring_forward.1} parent=5 // pred_region
        %s1058 = ssub.s32 %s21, 2
        // Predicated region
        $region61: #{action_scoring_forward.1} parent=59 // pred_check
          %p1059 = pneg %p202
        $region62: #{action_scoring_forward.1} parent=59 // pred_check_branch
          %1061 = sbr.rel (%p1059) target = $region64
        $region63: #{action_scoring_forward.1} parent=59 // pred_region
          %s1062 = sand.u32 %s187, 1
          %s1063 = scalar_lea.sflag [#allocation5], %s1062
          %s1064 = sand.u32 %s187, 1
          %s1065 = smul.addr %s1064, 4
          %s1066 = scalar_lea.vmem [#allocation6], %s1065
          %1068 = dma.done %s1063, 64
        $region64: #{action_scoring_forward.1} parent=59 // pred_fallthru
          _
      $region60: #{action_scoring_forward.1} parent=5 // pred_fallthru
        _
    $region6: #{action_scoring_forward.1} parent=1 // loop_footer
      %s25 = sadd.s32 1, %s21
    $region7: #{action_scoring_forward.1} parent=1 // loop_footer_branch
      %20 = sbr.rel target = $region3
    $region8: #{action_scoring_forward.1} parent=1 // loop_exit
      _
    %1069 = vsyncpa [#allocation4], 1
    %s1070 = scalar_lea.sflag [#allocation4], 1
    %1071 = vsyncpa %s1070, 1
    %1072 = vsyncpa [#allocation5], 1
    %s1073 = scalar_lea.sflag [#allocation5], 1
    %1074 = vsyncpa %s1073, 1

</llo_original>
